<compile_context>
chip_gen: v5e
topology: v5e:2x2
jax: 0.10.0
libtpu: 0.0.40
codegen_flags: <defaults>
</compile_context>

<pallas_src>
import functools

import jax
import jax.numpy as jnp
from jax import lax
from jax.experimental import pallas as pl
from jax.experimental.pallas import tpu as pltpu


def _encoder_tcn_kernel(x_ref, w_ref, b_ref, eye_ref, o_ref, *,
                        kernel_size, l_out, l_pool, batch_block, use_bf16):
    # x_ref:   (TB, C_in, L)        NCL input block (exactly as stored in HBM)
    # w_ref:   (K*C_in, C_out)      conv weight with taps folded into the contraction dim
    # b_ref:   (1, C_out)           bias
    # eye_ref: (C_out, C_out)       identity for the MXU-based (L_pool,C)->(C,L_pool) flip
    # o_ref:   (TB, C_out, L_pool)  NCL output block (time on lanes -> lane-dense store)
    w = w_ref[...]
    bias = b_ref[...]
    eye = eye_ref[...]
    if use_bf16:
        w = w.astype(jnp.bfloat16)

    for i in range(batch_block):                       # static, small
        x = x_ref[i]                                   # (C_in, L)
        if use_bf16:
            x = x.astype(jnp.bfloat16)

        # --- Conv1d (valid, stride 1): fused im2col over taps -> ONE MXU matmul.
        #     col[k*C_in + ci, t] = x[ci, t + k]
        col = jnp.concatenate(
            [x[:, k:k + l_out] for k in range(kernel_size)], axis=0)   # (K*C_in, L_out)

        # Contract the K*C_in axis of both operands.  Free dims come out as
        # (L_out, C_out): the NCL -> time-major layout change is absorbed by the
        # MXU operand handling instead of an extra HBM transpose pass.
        y = lax.dot_general(col, w, (((0,), (0,)), ((), ())),
                            preferred_element_type=jnp.float32)        # (L_out, C_out)
        y = y + bias

        # --- Dropout2d: identity (eval mode) ---

        # --- Norm_Relu over channels (lane axis here) ---
        a = jnp.maximum(y, 0.0)
        mx = jnp.max(a, axis=1, keepdims=True)                         # (L_out, 1)
        a = a * pl.reciprocal(mx + 1e-5, approx=True)                  # EUP, ~free

        # --- MaxPool1d(kernel_size=2, stride=2) over time (second-minor axis).
        #     This reshape splits the second-minor dim and keeps the minor (lane)
        #     dim contiguous, which is the cheap, well-supported layout case.
        ap = a[: 2 * l_pool, :].reshape(l_pool, 2, a.shape[1])
        pooled = jnp.max(ap, axis=1)                                   # (L_pool, C_out)

        # --- Flip to NCL for a lane-dense (time-on-lanes) store.  Done as a tiny
        #     identity matmul on the MXU (C_out^2 * L_pool MACs) rather than a
        #     vector transpose or a wrapper-side HBM transpose pass.
        pooled_ncl = lax.dot_general(eye, pooled, (((1,), (1,)), ((), ())),
                                     preferred_element_type=jnp.float32)  # (C_out, L_pool)
        o_ref[i] = pooled_ncl.astype(o_ref.dtype)


def encoder_tcn_forward(x_ncl, weight, bias, *, batch_block=1, use_bf16=False):
    """x_ncl: (B, C_in, L) float32 (PyTorch NCL layout).
    weight: (C_out, C_in, K) (PyTorch Conv1d layout).  bias: (C_out,).
    Returns (B, C_out, L_pool) matching the PyTorch module's output layout."""
    B, C_in, L = x_ncl.shape
    C_out, _, K = weight.shape
    L_out = L - K + 1
    L_pool = L_out // 2
    assert L_out >= 2, "MaxPool1d(2) needs at least 2 valid conv outputs"
    assert B % batch_block == 0, "batch_block must divide the batch size"

    # Fold the K taps into the contraction dim: w2[k*C_in + ci, co] = weight[co, ci, k]
    w2 = jnp.transpose(weight, (2, 1, 0)).reshape(K * C_in, C_out)
    b2 = bias.reshape(1, C_out)
    eye_c = jnp.eye(C_out, dtype=jnp.float32)

    kernel = functools.partial(
        _encoder_tcn_kernel, kernel_size=K, l_out=L_out, l_pool=L_pool,
        batch_block=batch_block, use_bf16=use_bf16)

    return pl.pallas_call(
        kernel,
        out_shape=jax.ShapeDtypeStruct((B, C_out, L_pool), x_ncl.dtype),
        grid=(B // batch_block,),
        in_specs=[
            pl.BlockSpec((batch_block, C_in, L), lambda b: (b, 0, 0)),
            pl.BlockSpec((K * C_in, C_out), lambda b: (0, 0)),
            pl.BlockSpec((1, C_out), lambda b: (0, 0)),
            pl.BlockSpec((C_out, C_out), lambda b: (0, 0)),
        ],
        out_specs=pl.BlockSpec((batch_block, C_out, L_pool), lambda b: (b, 0, 0)),
        compiler_params=pltpu.CompilerParams(
            dimension_semantics=("parallel",)),
    )(x_ncl, w2, b2, eye_c)


def _reference(x_ncl, weight, bias):
    """Pure-JAX reference of the same forward pass (for a sanity check)."""
    y = lax.conv_general_dilated(
        x_ncl, weight, window_strides=(1,), padding="VALID",
        dimension_numbers=("NCH", "OIH", "NCH"),
    ) + bias[None, :, None]
    a = jnp.maximum(y, 0.0)
    a = a / (jnp.max(a, axis=1, keepdims=True) + 1e-5)
    L_out = a.shape[-1]
    L_pool = L_out // 2
    a = a[..., : 2 * L_pool].reshape(a.shape[0], a.shape[1], L_pool, 2)
    return jnp.max(a, axis=-1)


if __name__ == "__main__":
    B, C_in, C_out, L, K = 2, 4, 8, 16, 3

    key = jax.random.PRNGKey(0)
    kx, kw, kb = jax.random.split(key, 3)
    x = jax.random.normal(kx, (B, C_in, L), dtype=jnp.float32)

    # Deterministic Conv1d parameter init (uniform(-bound, bound), PyTorch-style bound).
    fan_in = C_in * K
    bound = 1.0 / (fan_in ** 0.5)
    weight = jax.random.uniform(kw, (C_out, C_in, K), jnp.float32, -bound, bound)
    bias = jax.random.uniform(kb, (C_out,), jnp.float32, -bound, bound)

    out = jax.block_until_ready(encoder_tcn_forward(x, weight, bias, batch_block=1))
    ref = jax.block_until_ready(_reference(x, weight, bias))

    assert out.shape == (B, C_out, (L - K + 1) // 2), out.shape
    # Tolerance accommodates the approximate EUP reciprocal used for the normalization
    # (~1e-3 relative, per review guidance); outputs are in [0, 1] post-normalization.
    assert jnp.allclose(out, ref, atol=1e-2, rtol=1e-2), float(jnp.max(jnp.abs(out - ref)))

    print("KERNEL_OK")
</pallas_src>

<mosaic_0001>
module attributes {stable_mosaic.version = 11 : i64} {
  func.func @_encoder_tcn_kernel(%arg0: i32, %arg1: memref<1x4x16xf32, #tpu.memory_space<vmem>>, %arg2: memref<12x8xf32, #tpu.memory_space<vmem>>, %arg3: memref<1x8xf32, #tpu.memory_space<vmem>>, %arg4: memref<8x8xf32, #tpu.memory_space<vmem>>, %arg5: memref<1x8x7xf32, #tpu.memory_space<vmem>>) attributes {dimension_semantics = [#tpu.dimension_semantics<parallel>], iteration_bounds = array<i64: 2>, scalar_prefetch = 0 : i64, scratch_operands = 0 : i64, tpu.core_type = #tpu.core_type<tc>, window_params = [{transform_indices = @transform_0, window_bounds = array<i64: 1, 4, 16>}, {pipeline_mode = #tpu.pipeline_mode<synchronous>, transform_indices = @transform_1, window_bounds = array<i64: 12, 8>}, {pipeline_mode = #tpu.pipeline_mode<synchronous>, transform_indices = @transform_2, window_bounds = array<i64: 1, 8>}, {pipeline_mode = #tpu.pipeline_mode<synchronous>, transform_indices = @transform_3, window_bounds = array<i64: 8, 8>}, {transform_indices = @transform_4, window_bounds = array<i64: 1, 8, 7>}]} {
    %c0 = arith.constant 0 : index
    %c0_0 = arith.constant 0 : index
    %0 = vector.load %arg2[%c0, %c0_0] : memref<12x8xf32, #tpu.memory_space<vmem>>, vector<12x8xf32>
    %c0_1 = arith.constant 0 : index
    %c0_2 = arith.constant 0 : index
    %1 = vector.load %arg3[%c0_1, %c0_2] : memref<1x8xf32, #tpu.memory_space<vmem>>, vector<1x8xf32>
    %c0_3 = arith.constant 0 : index
    %c0_4 = arith.constant 0 : index
    %2 = vector.load %arg4[%c0_3, %c0_4] : memref<8x8xf32, #tpu.memory_space<vmem>>, vector<8x8xf32>
    %c0_5 = arith.constant 0 : index
    %c0_6 = arith.constant 0 : index
    %c0_7 = arith.constant 0 : index
    %3 = vector.load %arg1[%c0_5, %c0_6, %c0_7] : memref<1x4x16xf32, #tpu.memory_space<vmem>>, vector<1x4x16xf32>
    %4 = vector.shape_cast %3 : vector<1x4x16xf32> to vector<4x16xf32>
    %5 = vector.extract_strided_slice %4 {offsets = [0, 0], sizes = [4, 14], strides = [1, 1]} : vector<4x16xf32> to vector<4x14xf32>
    %6 = vector.extract_strided_slice %4 {offsets = [0, 1], sizes = [4, 14], strides = [1, 1]} : vector<4x16xf32> to vector<4x14xf32>
    %7 = vector.extract_strided_slice %4 {offsets = [0, 2], sizes = [4, 14], strides = [1, 1]} : vector<4x16xf32> to vector<4x14xf32>
    %8 = tpu.concatenate %5, %6, %7 in 0 : vector<4x14xf32>, vector<4x14xf32>, vector<4x14xf32> -> vector<12x14xf32>
    %cst = arith.constant dense<0.000000e+00> : vector<14x8xf32>
    %9 = tpu.matmul %8, %0, %cst {dimension_numbers = #tpu.dot_dimension_numbers<[0], [0], [1], [1], [0, 1, 1, 1], [], []>} : vector<12x14xf32>, vector<12x8xf32>, vector<14x8xf32> -> vector<14x8xf32>
    %10 = vector.broadcast %1 : vector<1x8xf32> to vector<14x8xf32>
    %11 = arith.addf %9, %10 : vector<14x8xf32>
    %cst_8 = arith.constant 0.000000e+00 : f32
    %12 = vector.broadcast %cst_8 : f32 to vector<14x8xf32>
    %13 = arith.maximumf %11, %12 : vector<14x8xf32>
    %cst_9 = arith.constant dense<0xFF800000> : vector<14xf32>
    %14 = vector.multi_reduction <maximumf>, %13, %cst_9 [1] : vector<14x8xf32> to vector<14xf32>
    %15 = vector.shape_cast %14 : vector<14xf32> to vector<14x1xf32>
    %cst_10 = arith.constant 9.99999974E-6 : f32
    %16 = vector.broadcast %cst_10 : f32 to vector<14x1xf32>
    %17 = arith.addf %15, %16 : vector<14x1xf32>
    %18 = tpu.reciprocal %17 {approx = true} : vector<14x1xf32> -> vector<14x1xf32>
    %19 = vector.broadcast %18 : vector<14x1xf32> to vector<14x8xf32>
    %20 = arith.mulf %13, %19 : vector<14x8xf32>
    %21 = vector.shape_cast %20 : vector<14x8xf32> to vector<7x2x8xf32>
    %cst_11 = arith.constant dense<0xFF800000> : vector<7x8xf32>
    %22 = vector.multi_reduction <maximumf>, %21, %cst_11 [1] : vector<7x2x8xf32> to vector<7x8xf32>
    %cst_12 = arith.constant dense<0.000000e+00> : vector<8x7xf32>
    %23 = tpu.matmul %2, %22, %cst_12 {dimension_numbers = #tpu.dot_dimension_numbers<[1], [1], [0], [0], [0, 0, 1, 0], [], []>} : vector<8x8xf32>, vector<7x8xf32>, vector<8x7xf32> -> vector<8x7xf32>
    %c0_13 = arith.constant 0 : index
    %c0_14 = arith.constant 0 : index
    %c0_15 = arith.constant 0 : index
    %24 = vector.load %arg5[%c0_13, %c0_14, %c0_15] : memref<1x8x7xf32, #tpu.memory_space<vmem>>, vector<1x8x7xf32>
    %25 = vector.shape_cast %24 : vector<1x8x7xf32> to vector<8x7xf32>
    %26 = vector.shape_cast %23 : vector<8x7xf32> to vector<1x8x7xf32>
    tpu.vector_store %arg5[%c0_13, %c0_14, %c0_15], %26 {strides = array<i32>} : memref<1x8x7xf32, #tpu.memory_space<vmem>>, vector<1x8x7xf32>,
    return
  }
  func.func @transform_0(%arg0: i32) -> (i32, i32, i32) {
    %c0_i32 = arith.constant 0 : i32
    %c0_i32_0 = arith.constant 0 : i32
    %c0_i32_1 = arith.constant 0 : i32
    return %arg0, %c0_i32, %c0_i32_0 : i32, i32, i32
  }
  func.func @transform_1(%arg0: i32) -> (i32, i32) {
    %c0_i32 = arith.constant 0 : i32
    %c0_i32_0 = arith.constant 0 : i32
    %c0_i32_1 = arith.constant 0 : i32
    return %c0_i32, %c0_i32_0 : i32, i32
  }
  func.func @transform_2(%arg0: i32) -> (i32, i32) {
    %c0_i32 = arith.constant 0 : i32
    %c0_i32_0 = arith.constant 0 : i32
    %c0_i32_1 = arith.constant 0 : i32
    return %c0_i32, %c0_i32_0 : i32, i32
  }
  func.func @transform_3(%arg0: i32) -> (i32, i32) {
    %c0_i32 = arith.constant 0 : i32
    %c0_i32_0 = arith.constant 0 : i32
    %c0_i32_1 = arith.constant 0 : i32
    return %c0_i32, %c0_i32_0 : i32, i32
  }
  func.func @transform_4(%arg0: i32) -> (i32, i32, i32) {
    %c0_i32 = arith.constant 0 : i32
    %c0_i32_0 = arith.constant 0 : i32
    %c0_i32_1 = arith.constant 0 : i32
    return %arg0, %c0_i32, %c0_i32_0 : i32, i32, i32
  }
}

</mosaic_0001>

<llo_original>
// kernel: tpu_custom_call.1
$region0: #{tpu_custom_call.1}
  #allocation0 [shape = 'u32[]', space=smem, size = 0x4, offset = 0x4, fixed_abs, tag = 'smem constant byte address 0x4 - core index']
  #allocation1 [shape = 'u32[72,128]{1,0:T(1,128)}', space=vmem, size = 0x9000, scoped, tag = 'internal scratch']
  %s0 = inlined_call_operand.vmem [shape: f32[2,4,16], index: 0, kind: input, shape index: {}]
  %s1 = inlined_call_operand.vmem [shape: f32[12,8], index: 1, kind: input, shape index: {}]
  %s2 = inlined_call_operand.vmem [shape: f32[1,8], index: 2, kind: input, shape index: {}]
  %s3 = inlined_call_operand.vmem [shape: f32[8,8], index: 3, kind: input, shape index: {}]
  %s4 = inlined_call_operand.vmem [shape: f32[2,8,7], index: 4, kind: output, shape index: {}]
  %s5 = sld [smem:[#allocation0]]
  $region49: #{tpu_custom_call.1} parent=0
    _
  %s7 = ssub.s32 1, %s5
  %s8 = scalar_select 0, %s7, %s5
  loop: start=0, step=1, limit=4
  $region2: #{tpu_custom_call.1} parent=0 // loop_pre_header
    _
  $region3: #{tpu_custom_call.1} parent=0 // loop_header
    %s10 = sphi 0, %s14
    %p11 = scmp.ge.s32.totalorder %s10, 4
    %s20 = sphi 0, %s22
    %s23 = sphi 0, %s20
    %s24 = sphi 0, %s23
    %s40 = sphi 0, %s24
    %s44 = sphi 0, %s44
    %s46 = sphi 0, %s44
    %s47 = sphi 0, %s46
    %s61 = sphi 0, %s47
    %s65 = sphi 0, %s65
    %s67 = sphi 0, %s65
    %s68 = sphi 0, %s67
    %s82 = sphi 0, %s68
    %s86 = sphi 0, %s86
    %s88 = sphi 0, %s86
    %s89 = sphi 0, %s88
    %s103 = sphi 0, %s89
    %s109 = sphi 0, %s111
    %s112 = sphi 0, %s109
    %s113 = sphi 0, %s112
    %s129 = sphi 0, %s113
  $region4: #{tpu_custom_call.1} parent=0 // loop_header_branch
    %13 = sbr.rel (%p11) target = $region8
  $region5: #{tpu_custom_call.1} parent=0 // loop_body
    %s15 = ssub.s32 %s10, 1
    %s16 = ssub.s32 %s10, 2
    %s17 = sadd.s32 %s10, 1
    %s18 = ssub.s32 %s10, %s17
    %p19 = scmp.eq.s32.totalorder %s18, 0
    %s21 = sadd.s32 %s20, 1
    %s22 = scalar_select %p19, %s20, %s21
    %p25 = pneg %p19
    %p26 = scmp.eq.s32.totalorder %s10, 1
    %p27 = por %p25, %p26
    %p28 = scmp.ne.s32.totalorder %s20, %s23
    %p29 = scmp.eq.s32.totalorder %s10, 0
    %p30 = por %p28, %p29
    %p31 = scmp.ne.s32.totalorder %s20, %s23
    %p32 = scmp.eq.s32.totalorder %s15, 1
    %p33 = por %p31, %p32
    %p34 = scmp.ne.s32.totalorder %s23, %s24
    %p35 = scmp.eq.s32.totalorder %s15, 0
    %p36 = por %p34, %p35
    %p37 = scmp.ne.s32.totalorder %s23, %s24
    %p38 = scmp.eq.s32.totalorder %s16, 1
    %p39 = por %p37, %p38
    %p41 = scmp.ne.s32.totalorder %s24, %s40
    %p42 = scmp.eq.s32.totalorder %s16, 0
    %p43 = por %p41, %p42
    %s45 = sadd.s32 %s44, 1
    %p48 = scmp.eq.s32.totalorder %s10, 1
    %p49 = scmp.ne.s32.totalorder %s44, %s46
    %p50 = scmp.eq.s32.totalorder %s10, 0
    %p51 = por %p49, %p50
    %p52 = scmp.ne.s32.totalorder %s44, %s46
    %p53 = scmp.eq.s32.totalorder %s15, 1
    %p54 = por %p52, %p53
    %p55 = scmp.ne.s32.totalorder %s46, %s47
    %p56 = scmp.eq.s32.totalorder %s15, 0
    %p57 = por %p55, %p56
    %p58 = scmp.ne.s32.totalorder %s46, %s47
    %p59 = scmp.eq.s32.totalorder %s16, 1
    %p60 = por %p58, %p59
    %p62 = scmp.ne.s32.totalorder %s47, %s61
    %p63 = scmp.eq.s32.totalorder %s16, 0
    %p64 = por %p62, %p63
    %s66 = sadd.s32 %s65, 1
    %p69 = scmp.eq.s32.totalorder %s10, 1
    %p70 = scmp.ne.s32.totalorder %s65, %s67
    %p71 = scmp.eq.s32.totalorder %s10, 0
    %p72 = por %p70, %p71
    %p73 = scmp.ne.s32.totalorder %s65, %s67
    %p74 = scmp.eq.s32.totalorder %s15, 1
    %p75 = por %p73, %p74
    %p76 = scmp.ne.s32.totalorder %s67, %s68
    %p77 = scmp.eq.s32.totalorder %s15, 0
    %p78 = por %p76, %p77
    %p79 = scmp.ne.s32.totalorder %s67, %s68
    %p80 = scmp.eq.s32.totalorder %s16, 1
    %p81 = por %p79, %p80
    %p83 = scmp.ne.s32.totalorder %s68, %s82
    %p84 = scmp.eq.s32.totalorder %s16, 0
    %p85 = por %p83, %p84
    %s87 = sadd.s32 %s86, 1
    %p90 = scmp.eq.s32.totalorder %s10, 1
    %p91 = scmp.ne.s32.totalorder %s86, %s88
    %p92 = scmp.eq.s32.totalorder %s10, 0
    %p93 = por %p91, %p92
    %p94 = scmp.ne.s32.totalorder %s86, %s88
    %p95 = scmp.eq.s32.totalorder %s15, 1
    %p96 = por %p94, %p95
    %p97 = scmp.ne.s32.totalorder %s88, %s89
    %p98 = scmp.eq.s32.totalorder %s15, 0
    %p99 = por %p97, %p98
    %p100 = scmp.ne.s32.totalorder %s88, %s89
    %p101 = scmp.eq.s32.totalorder %s16, 1
    %p102 = por %p100, %p101
    %p104 = scmp.ne.s32.totalorder %s89, %s103
    %p105 = scmp.eq.s32.totalorder %s16, 0
    %p106 = por %p104, %p105
    %s107 = ssub.s32 %s10, %s17
    %p108 = scmp.eq.s32.totalorder %s107, 0
    %s110 = sadd.s32 %s109, 1
    %s111 = scalar_select %p108, %s109, %s110
    %p114 = pneg %p108
    %p115 = scmp.eq.s32.totalorder %s10, 1
    %p116 = por %p114, %p115
    %p117 = scmp.ne.s32.totalorder %s109, %s112
    %p118 = scmp.eq.s32.totalorder %s10, 0
    %p119 = por %p117, %p118
    %p120 = scmp.ne.s32.totalorder %s109, %s112
    %p121 = scmp.eq.s32.totalorder %s15, 1
    %p122 = por %p120, %p121
    %p123 = scmp.ne.s32.totalorder %s112, %s113
    %p124 = scmp.eq.s32.totalorder %s15, 0
    %p125 = por %p123, %p124
    %p126 = scmp.ne.s32.totalorder %s112, %s113
    %p127 = scmp.eq.s32.totalorder %s16, 1
    %p128 = por %p126, %p127
    %p130 = scmp.ne.s32.totalorder %s113, %s129
    %p131 = scmp.eq.s32.totalorder %s16, 0
    %p132 = por %p130, %p131
    %p133 = scmp.le.s32.totalorder 1, %s10
    %p134 = scmp.lt.s32.totalorder %s10, 3
    %p135 = pnand %p133, %p134
    %p136 = pneg %p135
    // Predicated region
    $region9: #{tpu_custom_call.1} parent=5 // pred_check
      _
    $region10: #{tpu_custom_call.1} parent=5 // pred_check_branch
      %138 = sbr.rel (%p135) target = $region12
    $region11: #{tpu_custom_call.1} parent=5 // pred_region
      %s139 = ssub.s32 %s10, 1
      // Predicated region
      $region13: #{tpu_custom_call.1} parent=11 // pred_check
        %p140 = pneg %p57
      $region14: #{tpu_custom_call.1} parent=11 // pred_check_branch
        %142 = sbr.rel (%p140) target = $region16
      $region15: #{tpu_custom_call.1} parent=11 // pred_region
        _
      $region16: #{tpu_custom_call.1} parent=11 // pred_fallthru
        _
      // Predicated region
      $region17: #{tpu_custom_call.1} parent=11 // pred_check
        %p143 = pneg %p78
      $region18: #{tpu_custom_call.1} parent=11 // pred_check_branch
        %145 = sbr.rel (%p143) target = $region20
      $region19: #{tpu_custom_call.1} parent=11 // pred_region
        _
      $region20: #{tpu_custom_call.1} parent=11 // pred_fallthru
        _
      // Predicated region
      $region21: #{tpu_custom_call.1} parent=11 // pred_check
        %p146 = pneg %p99
      $region22: #{tpu_custom_call.1} parent=11 // pred_check_branch
        %148 = sbr.rel (%p146) target = $region24
      $region23: #{tpu_custom_call.1} parent=11 // pred_region
        _
      $region24: #{tpu_custom_call.1} parent=11 // pred_fallthru
        _
    $region12: #{tpu_custom_call.1} parent=5 // pred_fallthru
      _
    %p149 = scmp.lt.s32.totalorder %s10, 2
    // Predicated region
    $region25: #{tpu_custom_call.1} parent=5 // pred_check
      %p150 = pneg %p149
    $region26: #{tpu_custom_call.1} parent=5 // pred_check_branch
      %152 = sbr.rel (%p150) target = $region28
    $region27: #{tpu_custom_call.1} parent=5 // pred_region
      // Predicated region
      $region29: #{tpu_custom_call.1} parent=27 // pred_check
        %p153 = pneg %p30
      $region30: #{tpu_custom_call.1} parent=27 // pred_check_branch
        %155 = sbr.rel (%p153) target = $region32
      $region31: #{tpu_custom_call.1} parent=27 // pred_region
        %p156 = scmp.lt.s32.totalorder %s10, 1
        %s157 = scalar_select %p156, %s10, 1
        %s158 = smul.addr %s157, 4
        %s159 = scalar_lea.vmem %s0, %s158
      $region32: #{tpu_custom_call.1} parent=27 // pred_fallthru
        _
    $region28: #{tpu_custom_call.1} parent=5 // pred_fallthru
      _
    %p160 = scmp.le.s32.totalorder 1, %s10
    %p161 = scmp.lt.s32.totalorder %s10, 3
    %p162 = pnand %p160, %p161
    %p163 = pneg %p162
    // Predicated region
    $region33: #{tpu_custom_call.1} parent=5 // pred_check
      _
    $region34: #{tpu_custom_call.1} parent=5 // pred_check_branch
      %165 = sbr.rel (%p162) target = $region36
    $region35: #{tpu_custom_call.1} parent=5 // pred_region
      %s166 = ssub.s32 %s10, 1
      %p167 = scmp.lt.s32.totalorder %s15, 1
      %s168 = scalar_select %p167, %s15, 1
      %s169 = smul.addr %s168, 4
      %s170 = scalar_lea.vmem %s0, %s169
      %p171 = pneg %p36
      %p172 = pneg %p33
      %p173 = pneg %p57
      %p174 = pneg %p54
      %p175 = pneg %p78
      %p176 = pneg %p75
      %p177 = pneg %p99
      %p178 = pneg %p96
      %p179 = pneg %p125
      %p180 = pneg %p122
      %p181 = scmp.lt.s32.totalorder %s15, 1
      %s182 = scalar_select %p181, %s15, 1
      %s183 = smul.addr %s182, 8
      %s184 = scalar_lea.vmem %s4, %s183
      %p185 = scmp.lt.s32.totalorder %s15, 1
      %s186 = scalar_select %p185, %s15, 1
      %s187 = smul.addr %s186, 4
      %s188 = scalar_lea.vmem %s0, %s187
      %p189 = scmp.lt.s32.totalorder %s15, 1
      %s190 = scalar_select %p189, %s15, 1
      %s191 = smul.addr %s190, 8
      %s192 = scalar_lea.vmem %s4, %s191
      %v193 = vld [vmem:[%s1] sm:$0xff]
      %v194 = vld [vmem:[%s1 + $0x8] sm:$0xf]
      %v195 = vld [vmem:[%s2] sm:$0x1]
      %v196 = vld [vmem:[%s3] sm:$0xff]
      %v197 = vld [vmem:[%s188] sm:$0xf]
      %v199 = vrot.slane %v197, 4
      %200 = vrot.lane.b32.xlu0 %v199, 127
      %v201 = vpop.permute.xlu0 %200
      %203 = vrot.lane.b32.xlu0 %v197, 126
      %v204 = vpop.permute.xlu0 %203
      %vm206 = vcmask 1043456
      %v207 = vsel %vm206, %v197, %v201
      %v209 = vperm.slane %v195, 0
      %211 = vxpose.xlu0.b32.start [1/16] %v207, 128
      %212 = vxpose.xlu0.b32.cont [2/16] %v204, 128
      %213 = vxpose.xlu0.b32.cont [3/16] 0.0, 128
      %214 = vxpose.xlu0.b32.cont [4/16] 0.0, 128
      %215 = vxpose.xlu0.b32.cont [5/16] 0.0, 128
      %216 = vxpose.xlu0.b32.cont [6/16] 0.0, 128
      %217 = vxpose.xlu0.b32.cont [7/16] 0.0, 128
      %218 = vxpose.xlu0.b32.cont [8/16] 0.0, 128
      %219 = vxpose.xlu0.b32.cont [9/16] 0.0, 128
      %220 = vxpose.xlu0.b32.cont [10/16] 0.0, 128
      %221 = vxpose.xlu0.b32.cont [11/16] 0.0, 128
      %222 = vxpose.xlu0.b32.cont [12/16] 0.0, 128
      %223 = vxpose.xlu0.b32.cont [13/16] 0.0, 128
      %224 = vxpose.xlu0.b32.cont [14/16] 0.0, 128
      %225 = vxpose.xlu0.b32.cont [15/16] 0.0, 128
      %226 = vxpose.xlu0.b32.end [16/16] 0.0, 128
      %v227 = vpop.trf.xlu0
      %v228 = vpop.trf.xlu0
      %v229 = vpop.trf.xlu0
      %v230 = vpop.trf.xlu0
      %v231 = vpop.trf.xlu0
      %v232 = vpop.trf.xlu0
      %v233 = vpop.trf.xlu0
      %v234 = vpop.trf.xlu0
      %v235 = vpop.trf.xlu0
      %v236 = vpop.trf.xlu0
      %v237 = vpop.trf.xlu0
      %v238 = vpop.trf.xlu0
      %v239 = vpop.trf.xlu0
      %v240 = vpop.trf.xlu0
      %v241 = vpop.trf.xlu0
      %v242 = vpop.trf.xlu0
      %vm243 = vcmask 97280
      %v245 = vsel %vm243, %v227, 0
      %v248 = vsel %vm243, %v228, 0
      %v251 = vsel %vm206, %v194, 0
      %253 = vmatpush.msra.mxu0 0.0
      %254 = vmatpush.msra.mxu0 0.0
      %255 = vmatpush.msra.mxu0 0.0
      %256 = vmatpush.msra.mxu0 0.0
      %257 = vmatpush.msra.mxu0 0.0
      %258 = vmatpush.msra.mxu0 0.0
      %259 = vmatpush.msra.mxu0 0.0
      %260 = vmatpush.msra.mxu0 0.0
      %261 = vmatpush.msra.mxu0 0.0
      %262 = vmatpush.msra.mxu0 0.0
      %263 = vmatpush.msra.mxu0 0.0
      %264 = vmatpush.msra.mxu0 0.0
      %265 = vmatpush.msra.mxu0 0.0
      %266 = vmatpush.msra.mxu0 0.0
      %267 = vmatpush.msra.mxu0 %v251
      %268 = vmatpush.msra.mxu0 %v193
      %269 = vmatmul.f32.gmra.mxu0 %v245
      %v270 = vpop.f32.mrf.mxu0
      %v271 = vadd.f32 %v209, %v270
      %272 = vmatmul.f32.gmra.mxu0 %v248
      %v273 = vpop.f32.mrf.mxu0
      %v274 = vadd.f32 %v209, %v273
      %275 = vdwg.mxu0
      %v276 = vmax.f32 %v271, 0.0
      %v277 = vmax.f32 %v274, 0.0
      %vm278 = vcmask 64512
      %v279 = vsel %vm278, %v276, -inf
      %280 = vmax.xlane.f32.xlu0 %v279
      %v281 = vpop.xlane.xlu0 %280
      %vm282 = vcmask 62464
      %v283 = vsel %vm282, %v277, -inf
      %284 = vmax.xlane.f32.xlu0 %v283
      %v285 = vpop.xlane.xlu0 %284
      %v286 = vadd.f32 %v281, 1e-05
      %v287 = vadd.f32 %v285, 1e-05
      %v288 = vrcp.pop %v286
      %v289 = vrcp.pop %v287
      %v290 = vmul.f32 %v276, %v288
      %v291 = vmul.f32 %v277, %v289
      %v294 = vrot.slane %v290, 2
      %v295 = vrot.slane %v290, 4
      %v296 = vrot.slane %v290, 6
      %v297 = vrot.slane %v291, 2
      %v298 = vrot.slane %v291, 4
      %vm304 = vcmask 58368
      %v305 = vsel %vm304, %v290, -inf
      %v306 = vrot.slane %v305, 4
      %v307 = vmax.f32 %v305, %v306
      %v308 = vrot.slane %v307, 2
      %v309 = vmax.f32 %v307, %v308
      %v310 = vrot.slane %v309, 1
      %v311 = vmax.f32 %v309, %v310
      %v312 = vsel %vm304, %v294, -inf
      %v313 = vrot.slane %v312, 4
      %v314 = vmax.f32 %v312, %v313
      %v315 = vrot.slane %v314, 2
      %v316 = vmax.f32 %v314, %v315
      %v317 = vrot.slane %v316, 1
      %v318 = vmax.f32 %v316, %v317
      %v319 = vsel %vm304, %v295, -inf
      %v320 = vrot.slane %v319, 4
      %v321 = vmax.f32 %v319, %v320
      %v322 = vrot.slane %v321, 2
      %v323 = vmax.f32 %v321, %v322
      %v324 = vrot.slane %v323, 1
      %v325 = vmax.f32 %v323, %v324
      %v326 = vsel %vm304, %v296, -inf
      %v327 = vrot.slane %v326, 4
      %v328 = vmax.f32 %v326, %v327
      %v329 = vrot.slane %v328, 2
      %v330 = vmax.f32 %v328, %v329
      %v331 = vrot.slane %v330, 1
      %v332 = vmax.f32 %v330, %v331
      %v333 = vsel %vm304, %v291, -inf
      %v334 = vrot.slane %v333, 4
      %v335 = vmax.f32 %v333, %v334
      %v336 = vrot.slane %v335, 2
      %v337 = vmax.f32 %v335, %v336
      %v338 = vrot.slane %v337, 1
      %v339 = vmax.f32 %v337, %v338
      %v340 = vsel %vm304, %v297, -inf
      %v341 = vrot.slane %v340, 4
      %v342 = vmax.f32 %v340, %v341
      %v343 = vrot.slane %v342, 2
      %v344 = vmax.f32 %v342, %v343
      %v345 = vrot.slane %v344, 1
      %v346 = vmax.f32 %v344, %v345
      %v347 = vsel %vm304, %v298, -inf
      %v348 = vrot.slane %v347, 4
      %v349 = vmax.f32 %v347, %v348
      %v350 = vrot.slane %v349, 2
      %v351 = vmax.f32 %v349, %v350
      %v352 = vrot.slane %v351, 1
      %v353 = vmax.f32 %v351, %v352
      %vm361 = vcmask 1041409
      %v362 = vsel %vm361, %v318, %v311
      %vm363 = vcmask 1042434
      %v364 = vsel %vm363, %v325, %v362
      %vm365 = vcmask 1043459
      %v366 = vsel %vm365, %v332, %v364
      %vm367 = vcmask 1044484
      %v368 = vsel %vm367, %v339, %v366
      %vm369 = vcmask 1045509
      %v370 = vsel %vm369, %v346, %v368
      %vm371 = vcmask 1046534
      %v372 = vsel %vm371, %v353, %v370
      %v374 = vsel %vm278, %v196, 0
      %v376 = vsel %vm278, %v372, 0
      %378 = vmatpush.xpose.msra.mxu0 0.0
      %379 = vmatpush.xpose.msra.mxu0 0.0
      %380 = vmatpush.xpose.msra.mxu0 0.0
      %381 = vmatpush.xpose.msra.mxu0 0.0
      %382 = vmatpush.xpose.msra.mxu0 0.0
      %383 = vmatpush.xpose.msra.mxu0 0.0
      %384 = vmatpush.xpose.msra.mxu0 0.0
      %385 = vmatpush.xpose.msra.mxu0 0.0
      %386 = vmatpush.xpose.msra.mxu0 0.0
      %387 = vmatpush.xpose.msra.mxu0 0.0
      %388 = vmatpush.xpose.msra.mxu0 0.0
      %389 = vmatpush.xpose.msra.mxu0 0.0
      %390 = vmatpush.xpose.msra.mxu0 0.0
      %391 = vmatpush.xpose.msra.mxu0 0.0
      %392 = vmatpush.xpose.msra.mxu0 0.0
      %393 = vmatpush.xpose.msra.mxu0 %v376
      %394 = vmatmul.f32.gmra.mxu0 %v374
      %v395 = vpop.f32.mrf.mxu0
      %v396 = vadd.f32 0.0, %v395
      %397 = vdwg.mxu0
      %vm398 = vcmask 56320
      %399 = vst.msk [vmem:[%s192] sm:$0xff] %vm398, %v396
      %p400 = scmp.lt.s32.totalorder %s15, 1
      %s401 = scalar_select %p400, %s15, 1
      %s402 = smul.addr %s401, 8
      %s403 = scalar_lea.vmem %s4, %s402
      // Predicated region
      $region37: #{tpu_custom_call.1} parent=35 // pred_check
        %p404 = pneg %p122
      $region38: #{tpu_custom_call.1} parent=35 // pred_check_branch
        %406 = sbr.rel (%p404) target = $region40
      $region39: #{tpu_custom_call.1} parent=35 // pred_region
        _
      $region40: #{tpu_custom_call.1} parent=35 // pred_fallthru
        _
    $region36: #{tpu_custom_call.1} parent=5 // pred_fallthru
      _
    %p407 = scmp.le.s32.totalorder 2, %s10
    // Predicated region
    $region41: #{tpu_custom_call.1} parent=5 // pred_check
      %p408 = pneg %p407
    $region42: #{tpu_custom_call.1} parent=5 // pred_check_branch
      %410 = sbr.rel (%p408) target = $region44
    $region43: #{tpu_custom_call.1} parent=5 // pred_region
      %s411 = ssub.s32 %s10, 2
      // Predicated region
      $region45: #{tpu_custom_call.1} parent=43 // pred_check
        %p412 = pneg %p128
      $region46: #{tpu_custom_call.1} parent=43 // pred_check_branch
        %414 = sbr.rel (%p412) target = $region48
      $region47: #{tpu_custom_call.1} parent=43 // pred_region
        %p415 = scmp.lt.s32.totalorder %s16, 1
        %s416 = scalar_select %p415, %s16, 1
        %s417 = smul.addr %s416, 8
        %s418 = scalar_lea.vmem %s4, %s417
      $region48: #{tpu_custom_call.1} parent=43 // pred_fallthru
        _
    $region44: #{tpu_custom_call.1} parent=5 // pred_fallthru
      _
  $region6: #{tpu_custom_call.1} parent=0 // loop_footer
    %s14 = sadd.s32 1, %s10
  $region7: #{tpu_custom_call.1} parent=0 // loop_footer_branch
    %9 = sbr.rel target = $region3
  $region8: #{tpu_custom_call.1} parent=0 // loop_exit
    _

</llo_original>
